<compile_context>
chip_gen: v7x
topology: tpu7x:2x2x1
jax: 0.10.0
libtpu: 0.0.40
codegen_flags: <defaults>
</compile_context>

<pallas_src>
import jax
import jax.numpy as jnp
from jax.experimental import pallas as pl
from jax.experimental.pallas import tpu as pltpu

KH = KW = 3  # Conv2d(1, 1, 3) kernel size


def _cdiv(a, b):
    return -(-a // b)


def _make_kernel(has_y: bool, Ho: int, Wo: int):
    def kernel(w_ref, s_ref, x_ref, *rest):
        # w_ref: (3,3) f32 SMEM    -- conv weight (scalar reads)
        # s_ref: (2,)  f32 SMEM    -- [bias + gamma*beta, alpha]
        # x_ref: (TB, H, W)   VMEM -- input block (original dtype)
        # y_ref: (TB, Ho, Wo) VMEM -- addend block (original dtype, if has_y)
        # o_ref: (TB, Ho, Wo) VMEM -- output block
        if has_y:
            y_ref, o_ref = rest
        else:
            (o_ref,) = rest

        # Fused cross-correlation: one f32 accumulator, 9 unrolled
        # slice -> cast -> mul -> add steps; acc starts from the (0,0) term.
        acc = w_ref[0, 0] * x_ref[:, 0:Ho, 0:Wo].astype(jnp.float32)
        for kh in range(KH):
            for kw in range(KW):
                if kh == 0 and kw == 0:
                    continue
                acc = acc + w_ref[kh, kw] * (
                    x_ref[:, kh:kh + Ho, kw:kw + Wo].astype(jnp.float32))

        acc = acc + s_ref[0]                # bias + gamma*beta folded (Identity)
        if has_y:
            acc = acc + s_ref[1] * y_ref[...].astype(jnp.float32)
        # activation: torch.nn.Identity() (activation_cls=None default).
        # TODO(synk): other activation_cls would plug in here; the
        # bias/gamma*beta fold must then be split again.
        o_ref[...] = acc.astype(o_ref.dtype)

    return kernel


def _vmem_capacity_bytes():
    try:
        return int(pltpu.get_tpu_info().vmem_capacity_bytes)
    except Exception:
        return 64 << 20   # conservative fallback (v7x-sized)


def _pick_batch_tile(N, per_image_bytes, target_bytes):
    """Images per grid step: largest TB under the per-step byte budget, then
    keep >= 2 (preferably even) grid steps so v7x's two TensorCores both get
    work -- on single-TC v5e/v6e the extra step only costs ~0.35us."""
    if N <= 1:
        return 1
    tb = max(1, min(N, target_bytes // max(per_image_bytes, 1)))
    steps = _cdiv(N, tb)
    if steps < 2:
        tb = _cdiv(N, 2)
        steps = _cdiv(N, tb)
    if steps > 1 and steps % 2 == 1:
        tb_try = _cdiv(N, steps + 1)
        if tb_try >= 1 and _cdiv(N, tb_try) % 2 == 0:
            tb = tb_try
    return tb


def conv_bias_add_activation(x, weight, bias=None, y=None, alpha=1.0,
                             beta_gamma=None):
    """x: (N,1,H,W), weight: (1,1,3,3), bias: (1,) or None,
    y: (N,1,H-2,W-2) or None, beta_gamma: (beta, gamma) scalars or None."""
    N, C, H, W = x.shape
    assert C == 1, "Conv2d(1, 1, 3): single input channel"
    assert H >= KH and W >= KW
    Ho, Wo = H - KH + 1, W - KW + 1
    has_y = y is not None
    out_dtype = jnp.result_type(x.dtype, y.dtype) if has_y else x.dtype

    # Cheap layout plumbing only (no pad / crop): drop the size-1 channel dim.
    x3 = x.reshape(N, H, W)

    w2 = weight.reshape(KH, KW).astype(jnp.float32)
    bias_v = (jnp.float32(0.0) if bias is None
              else jnp.reshape(bias, ()).astype(jnp.float32))
    if beta_gamma is None:
        const = bias_v
    else:
        beta, gamma = beta_gamma
        const = bias_v + jnp.asarray(gamma, jnp.float32) * jnp.asarray(beta, jnp.float32)
    alpha_v = jnp.asarray(alpha if has_y else 0.0, jnp.float32)
    scalars = jnp.stack([jnp.asarray(const, jnp.float32), alpha_v])

    x_item = jnp.dtype(x.dtype).itemsize
    y_item = jnp.dtype(y.dtype).itemsize if has_y else 0
    o_item = jnp.dtype(out_dtype).itemsize

    # Generation-aware per-step block budget (~6-12 MiB of I/O per step).
    vmem_cap = _vmem_capacity_bytes()
    target_bytes = min(12 << 20, max(2 << 20, vmem_cap // 10))
    per_image = (H * W * x_item + Ho * Wo * (o_item + y_item)
                 + 4 * Ho * Wo * 4)           # + f32 accumulator/slice slack
    TB = _pick_batch_tile(N, per_image, target_bytes)
    grid = (_cdiv(N, TB),)    # tail block (if any) is clipped by Pallas

    in_specs = [
        pl.BlockSpec(memory_space=pltpu.MemorySpace.SMEM),      # weight (3,3)
        pl.BlockSpec(memory_space=pltpu.MemorySpace.SMEM),      # [const, alpha]
        pl.BlockSpec((TB, H, W), lambda n: (n, 0, 0)),          # x block
    ]
    operands = [w2, scalars, x3]
    if has_y:
        y3 = y.reshape(N, Ho, Wo)             # original dtype through the DMA
        in_specs.append(pl.BlockSpec((TB, Ho, Wo), lambda n: (n, 0, 0)))
        operands.append(y3)

    # VMEM footprint: double-buffered I/O blocks + in-kernel f32 accumulator
    # (+ slack for materialized slices).  Cap is generation-aware: leave
    # headroom on v7x's 64 MiB, use up to ~100 MiB of v5e/v6e's 128 MiB.
    blk_bytes = TB * (H * W * x_item + Ho * Wo * (o_item + y_item))
    tmp_bytes = 4 * TB * Ho * Wo * 4
    vmem_need = 2 * blk_bytes + tmp_bytes + (1 << 20)
    cap = (56 << 20) if vmem_cap <= (64 << 20) else (100 << 20)
    cp_kwargs = dict(dimension_semantics=("parallel",))
    if vmem_need > (16 << 20):
        cp_kwargs["vmem_limit_bytes"] = int(min(cap, max(vmem_need, 32 << 20)))

    flops = N * Ho * Wo * (2 * KH * KW + (2 if has_y else 0) + 1)
    bytes_accessed = (N * H * W * x_item
                      + (N * Ho * Wo * y_item if has_y else 0)
                      + N * Ho * Wo * o_item)

    out = pl.pallas_call(
        _make_kernel(has_y, Ho, Wo),
        out_shape=jax.ShapeDtypeStruct((N, Ho, Wo), out_dtype),
        grid=grid,
        in_specs=in_specs,
        out_specs=pl.BlockSpec((TB, Ho, Wo), lambda n: (n, 0, 0)),
        compiler_params=pltpu.CompilerParams(**cp_kwargs),
        cost_estimate=pl.CostEstimate(flops=flops, transcendentals=0,
                                      bytes_accessed=bytes_accessed),
    )(*operands)

    return out.reshape(N, 1, Ho, Wo)


def _reference(x, weight, bias, y, alpha, beta_gamma):
    out = jax.lax.conv_general_dilated(
        x.astype(jnp.float32), weight.astype(jnp.float32),
        window_strides=(1, 1), padding="VALID",
        dimension_numbers=("NCHW", "OIHW", "NCHW"))
    if bias is not None:
        out = out + bias.reshape(1, -1, 1, 1).astype(jnp.float32)
    if y is not None:
        out = out + alpha * y.astype(jnp.float32)
    # Identity activation
    if beta_gamma is not None:
        out = out + beta_gamma[1] * beta_gamma[0]
    return out


if __name__ == "__main__":
    key = jax.random.PRNGKey(0)
    kx, kw, kb, ky = jax.random.split(key, 4)

    N, C, H, W = 2, 1, 16, 16
    Ho, Wo = H - 2, W - 2

    x = jax.random.normal(kx, (N, C, H, W), jnp.float32)
    weight = jax.random.normal(kw, (1, 1, KH, KW), jnp.float32) * 0.3
    bias = jax.random.normal(kb, (1,), jnp.float32)
    y = jax.random.normal(ky, (N, 1, Ho, Wo), jnp.float32)
    alpha = 0.5
    beta_gamma = (1.25, 0.75)

    # full path: conv + bias + add(y, alpha) + Identity + add(beta, alpha=gamma)
    out = conv_bias_add_activation(x, weight, bias, y=y, alpha=alpha,
                                   beta_gamma=beta_gamma)
    out = jax.block_until_ready(out)
    ref = _reference(x, weight, bias, y, alpha, beta_gamma)

    # default-arg path: conv + bias only (specialized kernel without y stream)
    out2 = jax.block_until_ready(conv_bias_add_activation(x, weight, bias))
    ref2 = _reference(x, weight, bias, None, 1.0, None)

    assert out.shape == (N, 1, Ho, Wo)
    assert out.dtype == x.dtype
    assert jnp.allclose(out, ref, atol=1e-4, rtol=1e-4)
    assert jnp.allclose(out2, ref2, atol=1e-4, rtol=1e-4)
    print("KERNEL_OK")
</pallas_src>

<mosaic_0001>
module attributes {stable_mosaic.version = 11 : i64} {
  func.func @kernel(%arg0: i32, %arg1: memref<3x3xf32, #tpu.memory_space<smem>>, %arg2: memref<2xf32, #tpu.memory_space<smem>>, %arg3: memref<1x16x16xf32, #tpu.memory_space<vmem>>, %arg4: memref<1x14x14xf32, #tpu.memory_space<vmem>>, %arg5: memref<1x14x14xf32, #tpu.memory_space<vmem>>) attributes {dimension_semantics = [#tpu.dimension_semantics<parallel>], iteration_bounds = array<i64: 2>, scalar_prefetch = 0 : i64, scratch_operands = 0 : i64, tpu.core_type = #tpu.core_type<tc>, window_params = [{transform_indices = @transform_0, window_bounds = array<i64: 3, 3>}, {transform_indices = @transform_1, window_bounds = array<i64: 2>}, {transform_indices = @transform_2, window_bounds = array<i64: 1, 16, 16>}, {transform_indices = @transform_3, window_bounds = array<i64: 1, 14, 14>}, {transform_indices = @transform_4, window_bounds = array<i64: 1, 14, 14>}]} {
    %c0 = arith.constant 0 : index
    %c0_0 = arith.constant 0 : index
    %0 = memref.load %arg1[%c0, %c0_0] : memref<3x3xf32, #tpu.memory_space<smem>>
    %c0_1 = arith.constant 0 : index
    %c0_2 = arith.constant 0 : index
    %c0_3 = arith.constant 0 : index
    %1 = vector.load %arg3[%c0_1, %c0_2, %c0_3] : memref<1x16x16xf32, #tpu.memory_space<vmem>>, vector<1x14x14xf32>
    %2 = vector.broadcast %0 : f32 to vector<1x14x14xf32>
    %3 = arith.mulf %2, %1 : vector<1x14x14xf32>
    %c0_4 = arith.constant 0 : index
    %c1 = arith.constant 1 : index
    %4 = memref.load %arg1[%c0_4, %c1] : memref<3x3xf32, #tpu.memory_space<smem>>
    %c0_5 = arith.constant 0 : index
    %c0_6 = arith.constant 0 : index
    %c1_7 = arith.constant 1 : index
    %5 = vector.load %arg3[%c0_5, %c0_6, %c1_7] : memref<1x16x16xf32, #tpu.memory_space<vmem>>, vector<1x14x14xf32>
    %6 = vector.broadcast %4 : f32 to vector<1x14x14xf32>
    %7 = arith.mulf %6, %5 : vector<1x14x14xf32>
    %8 = arith.addf %3, %7 : vector<1x14x14xf32>
    %c0_8 = arith.constant 0 : index
    %c2 = arith.constant 2 : index
    %9 = memref.load %arg1[%c0_8, %c2] : memref<3x3xf32, #tpu.memory_space<smem>>
    %c0_9 = arith.constant 0 : index
    %c0_10 = arith.constant 0 : index
    %c2_11 = arith.constant 2 : index
    %10 = vector.load %arg3[%c0_9, %c0_10, %c2_11] : memref<1x16x16xf32, #tpu.memory_space<vmem>>, vector<1x14x14xf32>
    %11 = vector.broadcast %9 : f32 to vector<1x14x14xf32>
    %12 = arith.mulf %11, %10 : vector<1x14x14xf32>
    %13 = arith.addf %8, %12 : vector<1x14x14xf32>
    %c1_12 = arith.constant 1 : index
    %c0_13 = arith.constant 0 : index
    %14 = memref.load %arg1[%c1_12, %c0_13] : memref<3x3xf32, #tpu.memory_space<smem>>
    %c0_14 = arith.constant 0 : index
    %c1_15 = arith.constant 1 : index
    %c0_16 = arith.constant 0 : index
    %15 = vector.load %arg3[%c0_14, %c1_15, %c0_16] : memref<1x16x16xf32, #tpu.memory_space<vmem>>, vector<1x14x14xf32>
    %16 = vector.broadcast %14 : f32 to vector<1x14x14xf32>
    %17 = arith.mulf %16, %15 : vector<1x14x14xf32>
    %18 = arith.addf %13, %17 : vector<1x14x14xf32>
    %c1_17 = arith.constant 1 : index
    %c1_18 = arith.constant 1 : index
    %19 = memref.load %arg1[%c1_17, %c1_18] : memref<3x3xf32, #tpu.memory_space<smem>>
    %c0_19 = arith.constant 0 : index
    %c1_20 = arith.constant 1 : index
    %c1_21 = arith.constant 1 : index
    %20 = vector.load %arg3[%c0_19, %c1_20, %c1_21] : memref<1x16x16xf32, #tpu.memory_space<vmem>>, vector<1x14x14xf32>
    %21 = vector.broadcast %19 : f32 to vector<1x14x14xf32>
    %22 = arith.mulf %21, %20 : vector<1x14x14xf32>
    %23 = arith.addf %18, %22 : vector<1x14x14xf32>
    %c1_22 = arith.constant 1 : index
    %c2_23 = arith.constant 2 : index
    %24 = memref.load %arg1[%c1_22, %c2_23] : memref<3x3xf32, #tpu.memory_space<smem>>
    %c0_24 = arith.constant 0 : index
    %c1_25 = arith.constant 1 : index
    %c2_26 = arith.constant 2 : index
    %25 = vector.load %arg3[%c0_24, %c1_25, %c2_26] : memref<1x16x16xf32, #tpu.memory_space<vmem>>, vector<1x14x14xf32>
    %26 = vector.broadcast %24 : f32 to vector<1x14x14xf32>
    %27 = arith.mulf %26, %25 : vector<1x14x14xf32>
    %28 = arith.addf %23, %27 : vector<1x14x14xf32>
    %c2_27 = arith.constant 2 : index
    %c0_28 = arith.constant 0 : index
    %29 = memref.load %arg1[%c2_27, %c0_28] : memref<3x3xf32, #tpu.memory_space<smem>>
    %c0_29 = arith.constant 0 : index
    %c2_30 = arith.constant 2 : index
    %c0_31 = arith.constant 0 : index
    %30 = vector.load %arg3[%c0_29, %c2_30, %c0_31] : memref<1x16x16xf32, #tpu.memory_space<vmem>>, vector<1x14x14xf32>
    %31 = vector.broadcast %29 : f32 to vector<1x14x14xf32>
    %32 = arith.mulf %31, %30 : vector<1x14x14xf32>
    %33 = arith.addf %28, %32 : vector<1x14x14xf32>
    %c2_32 = arith.constant 2 : index
    %c1_33 = arith.constant 1 : index
    %34 = memref.load %arg1[%c2_32, %c1_33] : memref<3x3xf32, #tpu.memory_space<smem>>
    %c0_34 = arith.constant 0 : index
    %c2_35 = arith.constant 2 : index
    %c1_36 = arith.constant 1 : index
    %35 = vector.load %arg3[%c0_34, %c2_35, %c1_36] : memref<1x16x16xf32, #tpu.memory_space<vmem>>, vector<1x14x14xf32>
    %36 = vector.broadcast %34 : f32 to vector<1x14x14xf32>
    %37 = arith.mulf %36, %35 : vector<1x14x14xf32>
    %38 = arith.addf %33, %37 : vector<1x14x14xf32>
    %c2_37 = arith.constant 2 : index
    %c2_38 = arith.constant 2 : index
    %39 = memref.load %arg1[%c2_37, %c2_38] : memref<3x3xf32, #tpu.memory_space<smem>>
    %c0_39 = arith.constant 0 : index
    %c2_40 = arith.constant 2 : index
    %c2_41 = arith.constant 2 : index
    %40 = vector.load %arg3[%c0_39, %c2_40, %c2_41] : memref<1x16x16xf32, #tpu.memory_space<vmem>>, vector<1x14x14xf32>
    %41 = vector.broadcast %39 : f32 to vector<1x14x14xf32>
    %42 = arith.mulf %41, %40 : vector<1x14x14xf32>
    %43 = arith.addf %38, %42 : vector<1x14x14xf32>
    %c0_42 = arith.constant 0 : index
    %44 = memref.load %arg2[%c0_42] : memref<2xf32, #tpu.memory_space<smem>>
    %45 = vector.broadcast %44 : f32 to vector<1x14x14xf32>
    %46 = arith.addf %43, %45 : vector<1x14x14xf32>
    %c1_43 = arith.constant 1 : index
    %47 = memref.load %arg2[%c1_43] : memref<2xf32, #tpu.memory_space<smem>>
    %c0_44 = arith.constant 0 : index
    %c0_45 = arith.constant 0 : index
    %c0_46 = arith.constant 0 : index
    %48 = vector.load %arg4[%c0_44, %c0_45, %c0_46] : memref<1x14x14xf32, #tpu.memory_space<vmem>>, vector<1x14x14xf32>
    %49 = vector.broadcast %47 : f32 to vector<1x14x14xf32>
    %50 = arith.mulf %49, %48 : vector<1x14x14xf32>
    %51 = arith.addf %46, %50 : vector<1x14x14xf32>
    %c0_47 = arith.constant 0 : index
    %c0_48 = arith.constant 0 : index
    %c0_49 = arith.constant 0 : index
    %52 = vector.load %arg5[%c0_47, %c0_48, %c0_49] : memref<1x14x14xf32, #tpu.memory_space<vmem>>, vector<1x14x14xf32>
    tpu.vector_store %arg5[%c0_47, %c0_48, %c0_49], %51 {strides = array<i32>} : memref<1x14x14xf32, #tpu.memory_space<vmem>>, vector<1x14x14xf32>,
    return
  }
  func.func @transform_0(%arg0: i32) -> (i32, i32) {
    %c0_i32 = arith.constant 0 : i32
    %c0_i32_0 = arith.constant 0 : i32
    %c0_i32_1 = arith.constant 0 : i32
    return %c0_i32, %c0_i32_0 : i32, i32
  }
  func.func @transform_1(%arg0: i32) -> i32 {
    %c0_i32 = arith.constant 0 : i32
    %c0_i32_0 = arith.constant 0 : i32
    return %c0_i32 : i32
  }
  func.func @transform_2(%arg0: i32) -> (i32, i32, i32) {
    %c0_i32 = arith.constant 0 : i32
    %c0_i32_0 = arith.constant 0 : i32
    %c0_i32_1 = arith.constant 0 : i32
    return %arg0, %c0_i32, %c0_i32_0 : i32, i32, i32
  }
  func.func @transform_3(%arg0: i32) -> (i32, i32, i32) {
    %c0_i32 = arith.constant 0 : i32
    %c0_i32_0 = arith.constant 0 : i32
    %c0_i32_1 = arith.constant 0 : i32
    return %arg0, %c0_i32, %c0_i32_0 : i32, i32, i32
  }
  func.func @transform_4(%arg0: i32) -> (i32, i32, i32) {
    %c0_i32 = arith.constant 0 : i32
    %c0_i32_0 = arith.constant 0 : i32
    %c0_i32_1 = arith.constant 0 : i32
    return %arg0, %c0_i32, %c0_i32_0 : i32, i32, i32
  }
}

</mosaic_0001>

<llo_original>
// kernel: tpu_custom_call.1
$region0: #{tpu_custom_call.1}
  #allocation0 [shape = 'u32[]', space=smem, size = 0x4, offset = 0x4, fixed_abs, tag = 'smem constant byte address 0x4 - core index']
  #allocation1 [shape = 'u32[144,128]{1,0:T(1,128)}', space=vmem, size = 0x12000, scoped, tag = 'internal scratch']
  %s0 = inlined_call_operand.vmem [shape: f32[3,3], index: 0, kind: input, shape index: {}]
  %s1 = inlined_call_operand.vmem [shape: f32[2], index: 1, kind: input, shape index: {}]
  %s2 = inlined_call_operand.vmem [shape: f32[2,16,16], index: 2, kind: input, shape index: {}]
  %s3 = inlined_call_operand.vmem [shape: f32[2,14,14], index: 3, kind: input, shape index: {}]
  %s4 = inlined_call_operand.vmem [shape: f32[2,14,14], index: 4, kind: output, shape index: {}]
  %s5 = sld [smem:[#allocation0]]
  $region57: #{tpu_custom_call.1} parent=0
    _
  %s7 = ssub.s32 1, %s5
  %s8 = scalar_select 0, %s7, %s5
  $region1: #{tpu_custom_call.1} parent=0
    #allocation2 [shape = 'u8[2048]{0}', space=smem, size = 0x800, scoped, tag = 'input window, operand 0, single buffered']
    #allocation3 [shape = 's32[2]{0}', space=sflag, size = 0x8, scoped, tag = 'scoped memory for tpu_custom_call.1']
    #allocation4 [shape = 'u8[512]{0}', space=smem, size = 0x200, scoped, tag = 'input window, operand 1, single buffered']
    #allocation5 [shape = 's32[1]{0}', space=sflag, size = 0x4, scoped, tag = 'scoped memory for tpu_custom_call.1']
    %9 = vsyncpa [#allocation3], 0
    %10 = vsyncpa [#allocation5], 0
    loop: start=0, step=1, limit=4
    $region2: #{tpu_custom_call.1} parent=1 // loop_pre_header
      _
    $region3: #{tpu_custom_call.1} parent=1 // loop_header
      %s12 = sphi 0, %s16
      %p13 = scmp.ge.s32.totalorder %s12, 4
      %s20 = sphi 0, %s20
      %s22 = sphi 0, %s20
      %s23 = sphi 0, %s22
      %s37 = sphi 0, %s23
      %s41 = sphi 0, %s41
      %s43 = sphi 0, %s41
      %s44 = sphi 0, %s43
      %s58 = sphi 0, %s44
      %s64 = sphi 0, %s66
      %s67 = sphi 0, %s64
      %s68 = sphi 0, %s67
      %s84 = sphi 0, %s68
      %s90 = sphi 0, %s92
      %s93 = sphi 0, %s90
      %s94 = sphi 0, %s93
      %s110 = sphi 0, %s94
      %s116 = sphi 0, %s118
      %s119 = sphi 0, %s116
      %s120 = sphi 0, %s119
      %s136 = sphi 0, %s120
    $region4: #{tpu_custom_call.1} parent=1 // loop_header_branch
      %15 = sbr.rel (%p13) target = $region8
    $region5: #{tpu_custom_call.1} parent=1 // loop_body
      %s17 = ssub.s32 %s12, 1
      %s18 = ssub.s32 %s12, 2
      %s19 = sadd.s32 %s12, 1
      %s21 = sadd.s32 %s20, 1
      %p24 = scmp.eq.s32.totalorder %s12, 1
      %p25 = scmp.ne.s32.totalorder %s20, %s22
      %p26 = scmp.eq.s32.totalorder %s12, 0
      %p27 = por %p25, %p26
      %p28 = scmp.ne.s32.totalorder %s20, %s22
      %p29 = scmp.eq.s32.totalorder %s17, 1
      %p30 = por %p28, %p29
      %p31 = scmp.ne.s32.totalorder %s22, %s23
      %p32 = scmp.eq.s32.totalorder %s17, 0
      %p33 = por %p31, %p32
      %p34 = scmp.ne.s32.totalorder %s22, %s23
      %p35 = scmp.eq.s32.totalorder %s18, 1
      %p36 = por %p34, %p35
      %p38 = scmp.ne.s32.totalorder %s23, %s37
      %p39 = scmp.eq.s32.totalorder %s18, 0
      %p40 = por %p38, %p39
      %s42 = sadd.s32 %s41, 1
      %p45 = scmp.eq.s32.totalorder %s12, 1
      %p46 = scmp.ne.s32.totalorder %s41, %s43
      %p47 = scmp.eq.s32.totalorder %s12, 0
      %p48 = por %p46, %p47
      %p49 = scmp.ne.s32.totalorder %s41, %s43
      %p50 = scmp.eq.s32.totalorder %s17, 1
      %p51 = por %p49, %p50
      %p52 = scmp.ne.s32.totalorder %s43, %s44
      %p53 = scmp.eq.s32.totalorder %s17, 0
      %p54 = por %p52, %p53
      %p55 = scmp.ne.s32.totalorder %s43, %s44
      %p56 = scmp.eq.s32.totalorder %s18, 1
      %p57 = por %p55, %p56
      %p59 = scmp.ne.s32.totalorder %s44, %s58
      %p60 = scmp.eq.s32.totalorder %s18, 0
      %p61 = por %p59, %p60
      %s62 = ssub.s32 %s12, %s19
      %p63 = scmp.eq.s32.totalorder %s62, 0
      %s65 = sadd.s32 %s64, 1
      %s66 = scalar_select %p63, %s64, %s65
      %p69 = pneg %p63
      %p70 = scmp.eq.s32.totalorder %s12, 1
      %p71 = por %p69, %p70
      %p72 = scmp.ne.s32.totalorder %s64, %s67
      %p73 = scmp.eq.s32.totalorder %s12, 0
      %p74 = por %p72, %p73
      %p75 = scmp.ne.s32.totalorder %s64, %s67
      %p76 = scmp.eq.s32.totalorder %s17, 1
      %p77 = por %p75, %p76
      %p78 = scmp.ne.s32.totalorder %s67, %s68
      %p79 = scmp.eq.s32.totalorder %s17, 0
      %p80 = por %p78, %p79
      %p81 = scmp.ne.s32.totalorder %s67, %s68
      %p82 = scmp.eq.s32.totalorder %s18, 1
      %p83 = por %p81, %p82
      %p85 = scmp.ne.s32.totalorder %s68, %s84
      %p86 = scmp.eq.s32.totalorder %s18, 0
      %p87 = por %p85, %p86
      %s88 = ssub.s32 %s12, %s19
      %p89 = scmp.eq.s32.totalorder %s88, 0
      %s91 = sadd.s32 %s90, 1
      %s92 = scalar_select %p89, %s90, %s91
      %p95 = pneg %p89
      %p96 = scmp.eq.s32.totalorder %s12, 1
      %p97 = por %p95, %p96
      %p98 = scmp.ne.s32.totalorder %s90, %s93
      %p99 = scmp.eq.s32.totalorder %s12, 0
      %p100 = por %p98, %p99
      %p101 = scmp.ne.s32.totalorder %s90, %s93
      %p102 = scmp.eq.s32.totalorder %s17, 1
      %p103 = por %p101, %p102
      %p104 = scmp.ne.s32.totalorder %s93, %s94
      %p105 = scmp.eq.s32.totalorder %s17, 0
      %p106 = por %p104, %p105
      %p107 = scmp.ne.s32.totalorder %s93, %s94
      %p108 = scmp.eq.s32.totalorder %s18, 1
      %p109 = por %p107, %p108
      %p111 = scmp.ne.s32.totalorder %s94, %s110
      %p112 = scmp.eq.s32.totalorder %s18, 0
      %p113 = por %p111, %p112
      %s114 = ssub.s32 %s12, %s19
      %p115 = scmp.eq.s32.totalorder %s114, 0
      %s117 = sadd.s32 %s116, 1
      %s118 = scalar_select %p115, %s116, %s117
      %p121 = pneg %p115
      %p122 = scmp.eq.s32.totalorder %s12, 1
      %p123 = por %p121, %p122
      %p124 = scmp.ne.s32.totalorder %s116, %s119
      %p125 = scmp.eq.s32.totalorder %s12, 0
      %p126 = por %p124, %p125
      %p127 = scmp.ne.s32.totalorder %s116, %s119
      %p128 = scmp.eq.s32.totalorder %s17, 1
      %p129 = por %p127, %p128
      %p130 = scmp.ne.s32.totalorder %s119, %s120
      %p131 = scmp.eq.s32.totalorder %s17, 0
      %p132 = por %p130, %p131
      %p133 = scmp.ne.s32.totalorder %s119, %s120
      %p134 = scmp.eq.s32.totalorder %s18, 1
      %p135 = por %p133, %p134
      %p137 = scmp.ne.s32.totalorder %s120, %s136
      %p138 = scmp.eq.s32.totalorder %s18, 0
      %p139 = por %p137, %p138
      %p140 = scmp.le.s32.totalorder 1, %s12
      %p141 = scmp.lt.s32.totalorder %s12, 3
      %p142 = pnand %p140, %p141
      %p143 = pneg %p142
      // Predicated region
      $region9: #{tpu_custom_call.1} parent=5 // pred_check
        _
      $region10: #{tpu_custom_call.1} parent=5 // pred_check_branch
        %145 = sbr.rel (%p142) target = $region12
      $region11: #{tpu_custom_call.1} parent=5 // pred_region
        %s146 = ssub.s32 %s12, 1
        // Predicated region
        $region13: #{tpu_custom_call.1} parent=11 // pred_check
          %p147 = pneg %p33
        $region14: #{tpu_custom_call.1} parent=11 // pred_check_branch
          %149 = sbr.rel (%p147) target = $region16
        $region15: #{tpu_custom_call.1} parent=11 // pred_region
          %s151 = ssub.s32 64, 64
          %152 = vsyncadd [#allocation3], %s151
          %s154 = sshll.u32 %s0, 4
          %s155 = int_to_ptr.vmem [resolvable:$true] %s154
          %157 = dma.vmem_to_smem %s155, 64, [#allocation2], [#allocation3]
        $region16: #{tpu_custom_call.1} parent=11 // pred_fallthru
          _
        // Predicated region
        $region17: #{tpu_custom_call.1} parent=11 // pred_check
          %p158 = pneg %p54
        $region18: #{tpu_custom_call.1} parent=11 // pred_check_branch
          %160 = sbr.rel (%p158) target = $region20
        $region19: #{tpu_custom_call.1} parent=11 // pred_region
          %s162 = ssub.s32 16, 16
          %163 = vsyncadd [#allocation5], %s162
          %s165 = sshll.u32 %s1, 4
          %s166 = int_to_ptr.vmem [resolvable:$true] %s165
          %168 = dma.vmem_to_smem %s166, 16, [#allocation4], [#allocation5]
        $region20: #{tpu_custom_call.1} parent=11 // pred_fallthru
          _
      $region12: #{tpu_custom_call.1} parent=5 // pred_fallthru
        _
      %p169 = scmp.lt.s32.totalorder %s12, 2
      // Predicated region
      $region21: #{tpu_custom_call.1} parent=5 // pred_check
        %p170 = pneg %p169
      $region22: #{tpu_custom_call.1} parent=5 // pred_check_branch
        %172 = sbr.rel (%p170) target = $region24
      $region23: #{tpu_custom_call.1} parent=5 // pred_region
        // Predicated region
        $region25: #{tpu_custom_call.1} parent=23 // pred_check
          %p173 = pneg %p74
        $region26: #{tpu_custom_call.1} parent=23 // pred_check_branch
          %175 = sbr.rel (%p173) target = $region28
        $region27: #{tpu_custom_call.1} parent=23 // pred_region
          %p176 = scmp.lt.s32.totalorder %s12, 1
          %s177 = scalar_select %p176, %s12, 1
          %s178 = smul.addr %s177, 2
          %s179 = smul.addr %s178, 8
          %s180 = scalar_lea.vmem %s2, %s179
        $region28: #{tpu_custom_call.1} parent=23 // pred_fallthru
          _
        // Predicated region
        $region29: #{tpu_custom_call.1} parent=23 // pred_check
          %p181 = pneg %p100
        $region30: #{tpu_custom_call.1} parent=23 // pred_check_branch
          %183 = sbr.rel (%p181) target = $region32
        $region31: #{tpu_custom_call.1} parent=23 // pred_region
          %p184 = scmp.lt.s32.totalorder %s12, 1
          %s185 = scalar_select %p184, %s12, 1
          %s186 = smul.addr %s185, 2
          %s187 = smul.addr %s186, 8
          %s188 = scalar_lea.vmem %s3, %s187
        $region32: #{tpu_custom_call.1} parent=23 // pred_fallthru
          _
      $region24: #{tpu_custom_call.1} parent=5 // pred_fallthru
        _
      %p189 = scmp.le.s32.totalorder 1, %s12
      %p190 = scmp.lt.s32.totalorder %s12, 3
      %p191 = pnand %p189, %p190
      %p192 = pneg %p191
      // Predicated region
      $region33: #{tpu_custom_call.1} parent=5 // pred_check
        _
      $region34: #{tpu_custom_call.1} parent=5 // pred_check_branch
        %194 = sbr.rel (%p191) target = $region36
      $region35: #{tpu_custom_call.1} parent=5 // pred_region
        %s195 = ssub.s32 %s12, 1
        // Predicated region
        $region37: #{tpu_custom_call.1} parent=35 // pred_check
          %p196 = pneg %p33
        $region38: #{tpu_custom_call.1} parent=35 // pred_check_branch
          %198 = sbr.rel (%p196) target = $region40
        $region39: #{tpu_custom_call.1} parent=35 // pred_region
          %199 = dma.done [#allocation3], 64
        $region40: #{tpu_custom_call.1} parent=35 // pred_fallthru
          _
        // Predicated region
        $region41: #{tpu_custom_call.1} parent=35 // pred_check
          %p200 = pneg %p54
        $region42: #{tpu_custom_call.1} parent=35 // pred_check_branch
          %202 = sbr.rel (%p200) target = $region44
        $region43: #{tpu_custom_call.1} parent=35 // pred_region
          %203 = dma.done [#allocation5], 16
        $region44: #{tpu_custom_call.1} parent=35 // pred_fallthru
          _
        %204 = sfence
        %p205 = pneg %p33
        %p206 = pneg %p30
        %p207 = pneg %p54
        %p208 = pneg %p51
        %p209 = scmp.lt.s32.totalorder %s17, 1
        %s210 = scalar_select %p209, %s17, 1
        %s211 = smul.addr %s210, 2
        %s212 = smul.addr %s211, 8
        %s213 = scalar_lea.vmem %s2, %s212
        %p214 = pneg %p80
        %p215 = pneg %p77
        %p216 = scmp.lt.s32.totalorder %s17, 1
        %s217 = scalar_select %p216, %s17, 1
        %s218 = smul.addr %s217, 2
        %s219 = smul.addr %s218, 8
        %s220 = scalar_lea.vmem %s3, %s219
        %p221 = pneg %p106
        %p222 = pneg %p103
        %p223 = pneg %p132
        %p224 = pneg %p129
        %p225 = scmp.lt.s32.totalorder %s17, 1
        %s226 = scalar_select %p225, %s17, 1
        %s227 = smul.addr %s226, 2
        %s228 = smul.addr %s227, 8
        %s229 = scalar_lea.vmem %s4, %s228
        %p230 = scmp.lt.s32.totalorder %s17, 1
        %s231 = scalar_select %p230, %s17, 1
        %s232 = smul.addr %s231, 2
        %s233 = smul.addr %s232, 8
        %s234 = scalar_lea.vmem %s2, %s233
        %p235 = scmp.lt.s32.totalorder %s17, 1
        %s236 = scalar_select %p235, %s17, 1
        %s237 = smul.addr %s236, 2
        %s238 = smul.addr %s237, 8
        %s239 = scalar_lea.vmem %s3, %s238
        %p240 = scmp.lt.s32.totalorder %s17, 1
        %s241 = scalar_select %p240, %s17, 1
        %s242 = smul.addr %s241, 2
        %s243 = smul.addr %s242, 8
        %s244 = scalar_lea.vmem %s4, %s243
        %s245 = sld [smem:[#allocation2]]
        %v246 = vld [vmem:[%s234] sm:$0xff]
        %v247 = vld [vmem:[%s234 + $0x8] sm:$0x3f]
        %v248 = vstv %s245
        %v249 = vmul.f32 %v248, %v246
        %v250 = vmul.f32 %v248, %v247
        %s251 = sld [smem:[#allocation2 + $0x1]]
        %v252 = vstv %s251
        %v253 = vmul.f32 %v252, %v246
        %v254 = vmul.f32 %v252, %v247
        %257 = vrot.lane.b32.xlu0 %v253, 127
        %v258 = vpop.permute.xlu0 %257
        %259 = vrot.lane.b32.xlu0 %v254, 127
        %v260 = vpop.permute.xlu0 %259
        %v263 = vadd.f32 %v249, %v258
        %v264 = vadd.f32 %v250, %v260
        %s265 = sld [smem:[#allocation2 + $0x2]]
        %v266 = vstv %s265
        %v267 = vmul.f32 %v266, %v246
        %v268 = vmul.f32 %v266, %v247
        %271 = vrot.lane.b32.xlu0 %v267, 126
        %v272 = vpop.permute.xlu0 %271
        %273 = vrot.lane.b32.xlu0 %v268, 126
        %v274 = vpop.permute.xlu0 %273
        %v277 = vadd.f32 %v263, %v272
        %v278 = vadd.f32 %v264, %v274
        %s279 = sld [smem:[#allocation2 + $0x80]]
        %v280 = vld [vmem:[%s234 + $0x1] sm:$0xff]
        %v281 = vld [vmem:[%s234 + $0x9] sm:$0x3f]
        %v282 = vstv %s279
        %v283 = vmul.f32 %v282, %v280
        %v284 = vmul.f32 %v282, %v281
        %v285 = vadd.f32 %v277, %v283
        %v286 = vadd.f32 %v278, %v284
        %s287 = sld [smem:[#allocation2 + $0x81]]
        %v288 = vstv %s287
        %v289 = vmul.f32 %v288, %v280
        %v290 = vmul.f32 %v288, %v281
        %293 = vrot.lane.b32.xlu0 %v289, 127
        %v294 = vpop.permute.xlu0 %293
        %295 = vrot.lane.b32.xlu0 %v290, 127
        %v296 = vpop.permute.xlu0 %295
        %v299 = vadd.f32 %v285, %v294
        %v300 = vadd.f32 %v286, %v296
        %s301 = sld [smem:[#allocation2 + $0x82]]
        %v302 = vstv %s301
        %v303 = vmul.f32 %v302, %v280
        %v304 = vmul.f32 %v302, %v281
        %307 = vrot.lane.b32.xlu0 %v303, 126
        %v308 = vpop.permute.xlu0 %307
        %309 = vrot.lane.b32.xlu0 %v304, 126
        %v310 = vpop.permute.xlu0 %309
        %v313 = vadd.f32 %v299, %v308
        %v314 = vadd.f32 %v300, %v310
        %s315 = sld [smem:[#allocation2 + $0x100]]
        %v316 = vld [vmem:[%s234 + $0x2] sm:$0xff]
        %v317 = vld [vmem:[%s234 + $0xa] sm:$0x3f]
        %v318 = vstv %s315
        %v319 = vmul.f32 %v318, %v316
        %v320 = vmul.f32 %v318, %v317
        %v321 = vadd.f32 %v313, %v319
        %v322 = vadd.f32 %v314, %v320
        %s323 = sld [smem:[#allocation2 + $0x101]]
        %v324 = vstv %s323
        %v325 = vmul.f32 %v324, %v316
        %v326 = vmul.f32 %v324, %v317
        %329 = vrot.lane.b32.xlu0 %v325, 127
        %v330 = vpop.permute.xlu0 %329
        %331 = vrot.lane.b32.xlu0 %v326, 127
        %v332 = vpop.permute.xlu0 %331
        %v335 = vadd.f32 %v321, %v330
        %v336 = vadd.f32 %v322, %v332
        %s337 = sld [smem:[#allocation2 + $0x102]]
        %v338 = vstv %s337
        %v339 = vmul.f32 %v338, %v316
        %v340 = vmul.f32 %v338, %v317
        %343 = vrot.lane.b32.xlu0 %v339, 126
        %v344 = vpop.permute.xlu0 %343
        %345 = vrot.lane.b32.xlu0 %v340, 126
        %v346 = vpop.permute.xlu0 %345
        %v349 = vadd.f32 %v335, %v344
        %v350 = vadd.f32 %v336, %v346
        %s351 = sld [smem:[#allocation4]]
        %v352 = vstv %s351
        %v353 = vadd.f32 %v349, %v352
        %v354 = vadd.f32 %v350, %v352
        %s355 = sld [smem:[#allocation4 + $0x1]]
        %v356 = vld [vmem:[%s239] sm:$0xff]
        %v357 = vld [vmem:[%s239 + $0x8] sm:$0x3f]
        %v358 = vstv %s355
        %v359 = vmul.f32 %v358, %v356
        %v360 = vmul.f32 %v358, %v357
        %v361 = vadd.f32 %v353, %v359
        %v362 = vadd.f32 %v354, %v360
        %vm363 = vcmask 113664
        %364 = vst.msk [vmem:[%s244] sm:$0xff] %vm363, %v361
        %vm365 = vcmask 111616
        %366 = vst.msk [vmem:[%s244 + $0x8] sm:$0x3f] %vm365, %v362
        %p367 = scmp.lt.s32.totalorder %s17, 1
        %s368 = scalar_select %p367, %s17, 1
        %s369 = smul.addr %s368, 2
        %s370 = smul.addr %s369, 8
        %s371 = scalar_lea.vmem %s4, %s370
        // Predicated region
        $region45: #{tpu_custom_call.1} parent=35 // pred_check
          %p372 = pneg %p129
        $region46: #{tpu_custom_call.1} parent=35 // pred_check_branch
          %374 = sbr.rel (%p372) target = $region48
        $region47: #{tpu_custom_call.1} parent=35 // pred_region
          _
        $region48: #{tpu_custom_call.1} parent=35 // pred_fallthru
          _
      $region36: #{tpu_custom_call.1} parent=5 // pred_fallthru
        _
      %p375 = scmp.le.s32.totalorder 2, %s12
      // Predicated region
      $region49: #{tpu_custom_call.1} parent=5 // pred_check
        %p376 = pneg %p375
      $region50: #{tpu_custom_call.1} parent=5 // pred_check_branch
        %378 = sbr.rel (%p376) target = $region52
      $region51: #{tpu_custom_call.1} parent=5 // pred_region
        %s379 = ssub.s32 %s12, 2
        // Predicated region
        $region53: #{tpu_custom_call.1} parent=51 // pred_check
          %p380 = pneg %p135
        $region54: #{tpu_custom_call.1} parent=51 // pred_check_branch
          %382 = sbr.rel (%p380) target = $region56
        $region55: #{tpu_custom_call.1} parent=51 // pred_region
          %p383 = scmp.lt.s32.totalorder %s18, 1
          %s384 = scalar_select %p383, %s18, 1
          %s385 = smul.addr %s384, 2
          %s386 = smul.addr %s385, 8
          %s387 = scalar_lea.vmem %s4, %s386
        $region56: #{tpu_custom_call.1} parent=51 // pred_fallthru
          _
      $region52: #{tpu_custom_call.1} parent=5 // pred_fallthru
        _
    $region6: #{tpu_custom_call.1} parent=1 // loop_footer
      %s16 = sadd.s32 1, %s12
    $region7: #{tpu_custom_call.1} parent=1 // loop_footer_branch
      %11 = sbr.rel target = $region3
    $region8: #{tpu_custom_call.1} parent=1 // loop_exit
      _
    %388 = vsyncpa [#allocation3], 1
    %s389 = scalar_lea.sflag [#allocation3], 1
    %390 = vsyncpa %s389, 1
    %391 = vsyncpa [#allocation5], 1

</llo_original>
